<compile_context>
chip_gen: v5e
topology: v5e:2x2
jax: 0.10.0
libtpu: 0.0.40
codegen_flags: <defaults>
</compile_context>

<pallas_src>
import functools

import jax
import jax.numpy as jnp
from jax.experimental import pallas as pl
from jax.experimental.pallas import tpu as pltpu


_VMEM_LIMIT = 48 * 1024 * 1024  # explicit headroom; fits v7x's 64 MiB physical


def _pick_tile(dim, prefs):
    """Largest preferred tile that divides `dim`; else the full extent."""
    for p in prefs:
        if p <= dim and dim % p == 0:
            return p
    return dim


# ----------------------------------------------------------------------------
# Pallas kernels
# ----------------------------------------------------------------------------
def _dense_kernel(a_ref, w_ref, b_ref, o_ref, acc_ref, *, activation):
    k = pl.program_id(2)

    @pl.when(k == 0)
    def _():
        acc_ref[...] = jnp.zeros_like(acc_ref)

    acc_ref[...] += jnp.dot(a_ref[...], w_ref[...],
                            preferred_element_type=jnp.float32)

    @pl.when(k == pl.num_programs(2) - 1)
    def _():
        h = acc_ref[...] + b_ref[...].astype(jnp.float32)
        if activation == "gelu":
            h = jax.nn.gelu(h)
        o_ref[...] = h.astype(o_ref.dtype)


def pallas_dense(a, w, b, *, activation=None, out_dtype=jnp.bfloat16,
                 tm=256, tn=512, tk=512):
    """y = act(a @ w + b), tiled over (M, N, K) with a f32 VMEM accumulator.
    Operands are cast to bf16 (f32 accumulation on the MXU)."""
    M, K = a.shape
    K2, N = w.shape
    assert K == K2
    tm = _pick_tile(M, (tm, 256, 128, 64, 32, 16, 8))
    tn = _pick_tile(N, (tn, 256, 128))
    tk = _pick_tile(K, (tk, 256, 128))

    a = a.astype(jnp.bfloat16)
    w = w.astype(jnp.bfloat16)
    b = b.reshape(1, N).astype(jnp.float32)

    cost = pl.CostEstimate(
        flops=2 * M * N * K,
        transcendentals=(M * N if activation == "gelu" else 0),
        bytes_accessed=(M * K + K * N) * 2 + M * N * jnp.dtype(out_dtype).itemsize,
    )
    kernel = functools.partial(_dense_kernel, activation=activation)
    return pl.pallas_call(
        kernel,
        out_shape=jax.ShapeDtypeStruct((M, N), out_dtype),
        grid_spec=pltpu.PrefetchScalarGridSpec(
            num_scalar_prefetch=0,
            grid=(M // tm, N // tn, K // tk),
            in_specs=[
                pl.BlockSpec((tm, tk), lambda i, j, k: (i, k)),
                pl.BlockSpec((tk, tn), lambda i, j, k: (k, j)),
                pl.BlockSpec((1, tn), lambda i, j, k: (0, j)),
            ],
            out_specs=pl.BlockSpec((tm, tn), lambda i, j, k: (i, j)),
            scratch_shapes=[pltpu.VMEM((tm, tn), jnp.float32)],
        ),
        compiler_params=pltpu.CompilerParams(
            dimension_semantics=("parallel", "parallel", "arbitrary"),
            vmem_limit_bytes=_VMEM_LIMIT,
        ),
        cost_estimate=cost,
    )(a, w, b)


def _mlp_kernel(x_ref, wu_ref, bu_ref, wd_ref, bd_ref, o_ref, acc_ref):
    t = pl.program_id(1)

    @pl.when(t == 0)
    def _():
        acc_ref[...] = jnp.zeros_like(acc_ref)

    h = jnp.dot(x_ref[...], wu_ref[...], preferred_element_type=jnp.float32)
    h = jax.nn.gelu(h + bu_ref[...].astype(jnp.float32))
    acc_ref[...] += jnp.dot(h.astype(wd_ref.dtype), wd_ref[...],
                            preferred_element_type=jnp.float32)

    @pl.when(t == pl.num_programs(1) - 1)
    def _():
        o_ref[...] = (acc_ref[...] + bd_ref[...].astype(jnp.float32)
                      + x_ref[...].astype(jnp.float32)).astype(o_ref.dtype)


def pallas_mlp(x, w_up, b_up, w_down, b_down, *, out_dtype=jnp.bfloat16,
               tm=256, ti=512):
    """Fused GELU MLP with residual: (GELU(x@Wup+bup))@Wdown + bdown + x.
    The intermediate (tokens, inter) never touches HBM; inter is the
    tiled reduction axis of the down-projection."""
    M, H = x.shape
    _, I = w_up.shape
    tm = _pick_tile(M, (tm, 256, 128, 64, 32, 16, 8))
    ti = _pick_tile(I, (ti, 256, 128))

    x = x.astype(jnp.bfloat16)
    w_up = w_up.astype(jnp.bfloat16)
    w_down = w_down.astype(jnp.bfloat16)
    b_up = b_up.reshape(1, I).astype(jnp.float32)
    b_down = b_down.reshape(1, H).astype(jnp.float32)

    cost = pl.CostEstimate(
        flops=4 * M * I * H,
        transcendentals=M * I,
        bytes_accessed=(M * H + H * I + I * H) * 2 + M * H * 2,
    )
    return pl.pallas_call(
        _mlp_kernel,
        out_shape=jax.ShapeDtypeStruct((M, H), out_dtype),
        grid_spec=pltpu.PrefetchScalarGridSpec(
            num_scalar_prefetch=0,
            grid=(M // tm, I // ti),
            in_specs=[
                pl.BlockSpec((tm, H), lambda i, t: (i, 0)),
                pl.BlockSpec((H, ti), lambda i, t: (0, t)),
                pl.BlockSpec((1, ti), lambda i, t: (0, t)),
                pl.BlockSpec((ti, H), lambda i, t: (t, 0)),
                pl.BlockSpec((1, H), lambda i, t: (0, 0)),
            ],
            out_specs=pl.BlockSpec((tm, H), lambda i, t: (i, 0)),
            scratch_shapes=[pltpu.VMEM((tm, H), jnp.float32)],
        ),
        compiler_params=pltpu.CompilerParams(
            dimension_semantics=("parallel", "arbitrary"),
            vmem_limit_bytes=_VMEM_LIMIT,
        ),
        cost_estimate=cost,
    )(x, w_up, b_up, w_down, b_down)


def _lm_head_xent_kernel(h_ref, w_ref, b_ref, lab_ref,
                         logits_ref, loss_ref,
                         m_sc, l_sc, pick_sc):
    j = pl.program_id(1)
    tv = logits_ref.shape[-1]

    @pl.when(j == 0)
    def _():
        m_sc[...] = jnp.full_like(m_sc, -jnp.inf)
        l_sc[...] = jnp.zeros_like(l_sc)
        pick_sc[...] = jnp.zeros_like(pick_sc)

    logits = jnp.dot(h_ref[...], w_ref[...],
                     preferred_element_type=jnp.float32)
    logits = logits + b_ref[...].astype(jnp.float32)
    logits_ref[...] = logits.astype(logits_ref.dtype)

    labels = lab_ref[...]                                      # (tm, 1) int32

    # online logsumexp over the vocab tiles
    m_new = jnp.maximum(m_sc[...], jnp.max(logits, axis=-1, keepdims=True))
    alpha = jnp.exp(m_sc[...] - m_new)
    l_sc[...] = alpha * l_sc[...] + jnp.sum(jnp.exp(logits - m_new),
                                            axis=-1, keepdims=True)
    m_sc[...] = m_new

    # picked-label logit, using GLOBAL column indices for this vocab tile
    col = j * tv + jax.lax.broadcasted_iota(jnp.int32, logits.shape, 1)
    pick_sc[...] += jnp.sum(jnp.where(col == labels, logits, 0.0),
                            axis=-1, keepdims=True)

    @pl.when(j == pl.num_programs(1) - 1)
    def _():
        lse = m_sc[...] + jnp.log(l_sc[...])
        valid = labels != -100                                 # ignore_index
        loss_ref[...] = jnp.where(valid, lse - pick_sc[...], 0.0)


def pallas_lm_head_xent(h, w_lm, b_lm, shifted_labels, *,
                        logits_dtype=jnp.bfloat16, tm=256, tv=512):
    """Fused lm_head matmul + causal-LM cross-entropy.
    Writes the full logits (needed by the caller) once and computes the
    per-row CE with an online LSE so the logits are never re-read from HBM.
    Rows with label == -100 are ignored (contribute 0)."""
    M, H = h.shape
    _, V = w_lm.shape
    tm = _pick_tile(M, (tm, 256, 128, 64, 32, 16, 8))
    tv = _pick_tile(V, (tv, 256, 128))

    h = h.astype(jnp.bfloat16)
    w_lm = w_lm.astype(jnp.bfloat16)
    b_lm = b_lm.reshape(1, V).astype(jnp.float32)
    labels2d = shifted_labels.reshape(M, 1).astype(jnp.int32)

    cost = pl.CostEstimate(
        flops=2 * M * V * H,
        transcendentals=M * V,
        bytes_accessed=(M * H + H * V) * 2 + M * V * 2 + M * 8,
    )
    logits, per_row = pl.pallas_call(
        _lm_head_xent_kernel,
        out_shape=(jax.ShapeDtypeStruct((M, V), logits_dtype),
                   jax.ShapeDtypeStruct((M, 1), jnp.float32)),
        grid_spec=pltpu.PrefetchScalarGridSpec(
            num_scalar_prefetch=0,
            grid=(M // tm, V // tv),
            in_specs=[
                pl.BlockSpec((tm, H), lambda i, j: (i, 0)),
                pl.BlockSpec((H, tv), lambda i, j: (0, j)),
                pl.BlockSpec((1, tv), lambda i, j: (0, j)),
                pl.BlockSpec((tm, 1), lambda i, j: (i, 0)),
            ],
            out_specs=[pl.BlockSpec((tm, tv), lambda i, j: (i, j)),
                       pl.BlockSpec((tm, 1), lambda i, j: (i, 0))],
            scratch_shapes=[pltpu.VMEM((tm, 1), jnp.float32),
                            pltpu.VMEM((tm, 1), jnp.float32),
                            pltpu.VMEM((tm, 1), jnp.float32)],
        ),
        compiler_params=pltpu.CompilerParams(
            dimension_semantics=("parallel", "arbitrary"),
            vmem_limit_bytes=_VMEM_LIMIT,
        ),
        cost_estimate=cost,
    )(h, w_lm, b_lm, labels2d)

    valid = shifted_labels.reshape(-1) != -100
    denom = jnp.maximum(jnp.sum(valid), 1).astype(jnp.float32)
    loss = jnp.sum(per_row) / denom
    return logits, loss


def fused_kv_projection(x, wk, bk, wv, bv):
    """Single dense call for K and V: one A-tile DMA, lane-dense (>=128 wide,
    zero-padded) output tile instead of two sub-128-lane masked-store kernels."""
    H, Nk = wk.shape
    _, Nv = wv.shape
    N = Nk + Nv
    n_pad = (-N) % 128
    w = jnp.concatenate([wk, wv], axis=1)
    b = jnp.concatenate([bk, bv], axis=0)
    if n_pad:
        w = jnp.pad(w, ((0, 0), (0, n_pad)))
        b = jnp.pad(b, (0, n_pad))
    kv = pallas_dense(x, w, b)
    return kv[:, :Nk], kv[:, Nk:N]


# ----------------------------------------------------------------------------
# Synthetic "optimized_model" (tiny causal LM) + output_hook repackaging
# ----------------------------------------------------------------------------
class Config:
    use_return_dict = True
    output_hidden_states = False
    output_attentions = False
    architectures = ["GPT2LMHeadModel"]


def init_params(key, vocab, hidden, inter, num_heads, head_dim):
    ks = jax.random.split(key, 6)
    s = 0.02
    return {
        "embed": jax.random.normal(ks[0], (vocab, hidden), jnp.float32) * s,
        "wk": jax.random.normal(ks[1], (hidden, num_heads * head_dim)) * s,
        "bk": jnp.zeros((num_heads * head_dim,), jnp.float32),
        "wv": jax.random.normal(ks[2], (hidden, num_heads * head_dim)) * s,
        "bv": jnp.zeros((num_heads * head_dim,), jnp.float32),
        "w_up": jax.random.normal(ks[3], (hidden, inter)) * s,
        "b_up": jnp.zeros((inter,), jnp.float32),
        "w_down": jax.random.normal(ks[4], (inter, hidden)) * s,
        "b_down": jnp.zeros((hidden,), jnp.float32),
        "w_lm": jax.random.normal(ks[5], (hidden, vocab)) * s,
        "b_lm": jnp.zeros((vocab,), jnp.float32),
    }


def optimized_model(params, input_ids, labels, num_heads, head_dim):
    """Returns the raw output tuple a HF causal LM would: (loss?, logits, pkv)."""
    B, S = input_ids.shape
    V, H = params["embed"].shape

    # TODO(synk): embedding gather has no clean dense-BlockSpec equivalent;
    # kept as an XLA gather (glue).
    x = params["embed"][input_ids].reshape(B * S, H).astype(jnp.bfloat16)

    # past_key_values (single synthetic layer): fused K/V projection
    k, v = fused_kv_projection(x, params["wk"], params["bk"],
                               params["wv"], params["bv"])
    k = k.reshape(B, S, num_heads, head_dim).transpose(0, 2, 1, 3)
    v = v.reshape(B, S, num_heads, head_dim).transpose(0, 2, 1, 3)
    past_key_values = ((k, v),)

    # fully fused MLP block (up + GELU + down + residual)
    h = pallas_mlp(x, params["w_up"], params["b_up"],
                   params["w_down"], params["b_down"])

    if labels is not None:
        # shift: row (b, s) is trained against labels[b, s+1]; last position
        # (and any -100 labels) is ignored — same as CrossEntropyLoss(-100).
        shifted = jnp.concatenate(
            [labels[:, 1:].astype(jnp.int32),
             jnp.full((B, 1), -100, dtype=jnp.int32)], axis=1).reshape(-1)
        logits, loss = pallas_lm_head_xent(h, params["w_lm"], params["b_lm"],
                                           shifted)
        return (loss, logits.reshape(B, S, V), past_key_values)

    logits = pallas_dense(h, params["w_lm"], params["b_lm"]).reshape(B, S, V)
    return (logits, past_key_values)


def output_hook(config, args, kwargs, outputs):
    """Faithful port of the IPEX output_hook tuple->struct repackaging."""
    if config.use_return_dict or kwargs.get("return_dict", False):
        idx = 0
        loss = None
        hidden_states = None
        attentions = None
        if "labels" in kwargs:
            loss = outputs[idx]
            idx += 1
        logits = outputs[idx]
        idx += 1
        past_key_values = outputs[idx]
        idx += 1
        if kwargs.get("output_hidden_states", False) or config.output_hidden_states:
            hidden_states = outputs[idx]
            idx += 1
        if kwargs.get("output_attentions", False) or config.output_attentions:
            attentions = outputs[idx]
            idx += 1
        # CausalLMOutputWithPast analog (non-T5 / non-Bloom branch)
        return {
            "loss": loss,
            "logits": logits,
            "past_key_values": past_key_values,
            "hidden_states": hidden_states,
            "attentions": attentions,
        }
    return outputs


class IPEXLLMModelReturn:
    def __init__(self, params, config, num_heads, head_dim):
        self.params = params
        self.config = config
        self.num_heads = num_heads
        self.head_dim = head_dim

    def __call__(self, *args, **kwargs):
        input_ids = kwargs.get("input_ids", args[0] if args else None)
        labels = kwargs.get("labels", None)
        outputs = optimized_model(
            self.params, input_ids, labels, self.num_heads, self.head_dim
        )
        return output_hook(self.config, args, kwargs, outputs)


# ----------------------------------------------------------------------------
def reference_forward(params, input_ids, labels):
    """Pure-JAX f32 reference for correctness checking."""
    B, S = input_ids.shape
    V, H = params["embed"].shape
    x = params["embed"][input_ids].reshape(B * S, H)
    h = (jax.nn.gelu(x @ params["w_up"] + params["b_up"]) @ params["w_down"]
         + params["b_down"] + x)
    logits = (h @ params["w_lm"] + params["b_lm"]).reshape(B, S, V)
    shift_logits = logits[:, :-1, :].reshape(-1, V)
    shift_labels = labels[:, 1:].reshape(-1)
    lse = jax.scipy.special.logsumexp(shift_logits, axis=-1)
    picked = jnp.take_along_axis(shift_logits, shift_labels[:, None], axis=-1)[:, 0]
    mask = shift_labels != -100
    loss = jnp.sum(jnp.where(mask, lse - picked, 0.0)) / jnp.maximum(
        jnp.sum(mask), 1)
    return logits, loss


if __name__ == "__main__":
    B, S, H, V = 2, 8, 32, 256
    NUM_HEADS, HEAD_DIM, INTER = 4, 8, 64

    key = jax.random.PRNGKey(0)
    k_param, k_ids = jax.random.split(key)
    params = init_params(k_param, V, H, INTER, NUM_HEADS, HEAD_DIM)

    input_ids = jax.random.randint(k_ids, (B, S), 0, V, dtype=jnp.int32)
    labels = input_ids  # standard causal-LM training target

    model = IPEXLLMModelReturn(params, Config(), NUM_HEADS, HEAD_DIM)
    out = model(input_ids=input_ids, labels=labels, return_dict=True)

    jax.block_until_ready(out["loss"])
    jax.block_until_ready(out["logits"])
    jax.block_until_ready(out["past_key_values"])

    assert out["logits"].shape == (B, S, V)
    assert out["loss"].shape == ()
    assert out["past_key_values"][0][0].shape == (B, NUM_HEADS, S, HEAD_DIM)

    # numerical sanity check against a pure-JAX f32 reference (bf16 tolerance)
    ref_logits, ref_loss = reference_forward(params, input_ids, labels)
    assert jnp.allclose(out["loss"].astype(jnp.float32), ref_loss,
                        rtol=2e-2, atol=2e-2)
    assert jnp.allclose(out["logits"].astype(jnp.float32), ref_logits,
                        rtol=1e-1, atol=5e-3)

    print("KERNEL_OK")
</pallas_src>

<mosaic_0001>
module attributes {stable_mosaic.version = 11 : i64} {
  func.func @_dense_kernel(%arg0: i32, %arg1: i32, %arg2: i32, %arg3: memref<16x32xbf16, #tpu.memory_space<vmem>>, %arg4: memref<32x128xbf16, #tpu.memory_space<vmem>>, %arg5: memref<1x128xf32, #tpu.memory_space<vmem>>, %arg6: memref<16x128xbf16, #tpu.memory_space<vmem>>, %arg7: memref<16x128xf32, #tpu.memory_space<vmem>>) attributes {dimension_semantics = [#tpu.dimension_semantics<parallel>, #tpu.dimension_semantics<parallel>, #tpu.dimension_semantics<arbitrary>], iteration_bounds = array<i64: 1, 1, 1>, scalar_prefetch = 0 : i64, scratch_operands = 1 : i64, tpu.core_type = #tpu.core_type<tc>, window_params = [{transform_indices = @transform_0, window_bounds = array<i64: 16, 32>}, {transform_indices = @transform_1, window_bounds = array<i64: 32, 128>}, {transform_indices = @transform_2, window_bounds = array<i64: 1, 128>}, {transform_indices = @transform_3, window_bounds = array<i64: 16, 128>}]} {
    %c0_i32 = arith.constant 0 : i32
    %0 = arith.cmpi eq, %arg2, %c0_i32 : i32
    %1 = arith.extui %0 : i1 to i32
    %c0_i32_0 = arith.constant 0 : i32
    %2 = arith.cmpi ne, %1, %c0_i32_0 : i32
    scf.if %2 {
      %cst_10 = arith.constant 0.000000e+00 : f32
      %12 = vector.broadcast %cst_10 : f32 to vector<16x128xf32>
      %c0_11 = arith.constant 0 : index
      %c0_12 = arith.constant 0 : index
      %13 = vector.load %arg7[%c0_11, %c0_12] : memref<16x128xf32, #tpu.memory_space<vmem>>, vector<16x128xf32>
      tpu.vector_store %arg7[%c0_11, %c0_12], %12 {strides = array<i32>} : memref<16x128xf32, #tpu.memory_space<vmem>>, vector<16x128xf32>,
    } else {
    }
    %c0 = arith.constant 0 : index
    %c0_1 = arith.constant 0 : index
    %3 = vector.load %arg7[%c0, %c0_1] : memref<16x128xf32, #tpu.memory_space<vmem>>, vector<16x128xf32>
    %c0_2 = arith.constant 0 : index
    %c0_3 = arith.constant 0 : index
    %4 = vector.load %arg3[%c0_2, %c0_3] : memref<16x32xbf16, #tpu.memory_space<vmem>>, vector<16x32xbf16>
    %c0_4 = arith.constant 0 : index
    %c0_5 = arith.constant 0 : index
    %5 = vector.load %arg4[%c0_4, %c0_5] : memref<32x128xbf16, #tpu.memory_space<vmem>>, vector<32x128xbf16>
    %cst = arith.constant dense<0.000000e+00> : vector<16x128xf32>
    %6 = tpu.matmul %4, %5, %cst {dimension_numbers = #tpu.dot_dimension_numbers<[1], [0], [0], [1], [0, 0, 1, 1], [], []>} : vector<16x32xbf16>, vector<32x128xbf16>, vector<16x128xf32> -> vector<16x128xf32>
    %7 = arith.addf %3, %6 : vector<16x128xf32>
    %c0_6 = arith.constant 0 : index
    %c0_7 = arith.constant 0 : index
    %8 = vector.load %arg7[%c0_6, %c0_7] : memref<16x128xf32, #tpu.memory_space<vmem>>, vector<16x128xf32>
    tpu.vector_store %arg7[%c0_6, %c0_7], %7 {strides = array<i32>} : memref<16x128xf32, #tpu.memory_space<vmem>>, vector<16x128xf32>,
    %c0_i32_8 = arith.constant 0 : i32
    %9 = arith.cmpi eq, %arg2, %c0_i32_8 : i32
    %10 = arith.extui %9 : i1 to i32
    %c0_i32_9 = arith.constant 0 : i32
    %11 = arith.cmpi ne, %10, %c0_i32_9 : i32
    scf.if %11 {
      %c0_10 = arith.constant 0 : index
      %c0_11 = arith.constant 0 : index
      %12 = vector.load %arg7[%c0_10, %c0_11] : memref<16x128xf32, #tpu.memory_space<vmem>>, vector<16x128xf32>
      %c0_12 = arith.constant 0 : index
      %c0_13 = arith.constant 0 : index
      %13 = vector.load %arg5[%c0_12, %c0_13] : memref<1x128xf32, #tpu.memory_space<vmem>>, vector<1x128xf32>
      %14 = vector.broadcast %13 : vector<1x128xf32> to vector<16x128xf32>
      %15 = arith.addf %12, %14 : vector<16x128xf32>
      %16 = arith.truncf %15 : vector<16x128xf32> to vector<16x128xbf16>
      %c0_14 = arith.constant 0 : index
      %c0_15 = arith.constant 0 : index
      %17 = vector.load %arg6[%c0_14, %c0_15] : memref<16x128xbf16, #tpu.memory_space<vmem>>, vector<16x128xbf16>
      tpu.vector_store %arg6[%c0_14, %c0_15], %16 {strides = array<i32>} : memref<16x128xbf16, #tpu.memory_space<vmem>>, vector<16x128xbf16>,
    } else {
    }
    return
  }
  func.func @transform_0(%arg0: i32, %arg1: i32, %arg2: i32) -> (i32, i32) {
    %c0_i32 = arith.constant 0 : i32
    return %arg0, %arg2 : i32, i32
  }
  func.func @transform_1(%arg0: i32, %arg1: i32, %arg2: i32) -> (i32, i32) {
    %c0_i32 = arith.constant 0 : i32
    return %arg2, %arg1 : i32, i32
  }
  func.func @transform_2(%arg0: i32, %arg1: i32, %arg2: i32) -> (i32, i32) {
    %c0_i32 = arith.constant 0 : i32
    %c0_i32_0 = arith.constant 0 : i32
    return %c0_i32, %arg1 : i32, i32
  }
  func.func @transform_3(%arg0: i32, %arg1: i32, %arg2: i32) -> (i32, i32) {
    %c0_i32 = arith.constant 0 : i32
    return %arg0, %arg1 : i32, i32
  }
}

</mosaic_0001>

<llo_original>
// kernel: tpu_custom_call.1
$region0: #{tpu_custom_call.1}
  #allocation0 [shape = 'u32[]', space=smem, size = 0x4, offset = 0x4, fixed_abs, tag = 'smem constant byte address 0x4 - core index']
  #allocation1 [shape = 'u32[72,128]{1,0:T(1,128)}', space=vmem, size = 0x9000, scoped, tag = 'internal scratch']
  #allocation2 [shape = 'f32[16,128]{1,0:T(8,128)}', space=vmem, size = 0x2000, scoped, tag = 'scratch operand']
  %s0 = inlined_call_operand.hbm [shape: bf16[16,32], index: 0, kind: input, shape index: {}]
  %s1 = inlined_call_operand.hbm [shape: bf16[32,128], index: 1, kind: input, shape index: {}]
  %s2 = inlined_call_operand.vmem [shape: f32[1,128], index: 2, kind: input, shape index: {}]
  %s3 = inlined_call_operand.hbm [shape: bf16[16,128], index: 3, kind: output, shape index: {}]
  %s4 = sld [smem:[#allocation0]]
  $region38: #{tpu_custom_call.1} parent=0
    _
  %s6 = ssub.s32 1, %s4
  %s7 = scalar_select 0, %s6, %s4
  $region1: #{tpu_custom_call.1} parent=0
    #allocation3 [shape = 'u8[4096]{0}', space=vmem, size = 0x1000, scoped, tag = 'input window, operand 0, single buffered']
    #allocation4 [shape = 's32[1]{0}', space=sflag, size = 0x4, scoped, tag = 'scoped memory for tpu_custom_call.1']
    #allocation5 [shape = 's32[1]{0}', space=sflag, size = 0x4, scoped, tag = 'scoped memory for tpu_custom_call.1']
    #allocation6 [shape = 'u8[8192]{0}', space=vmem, size = 0x2000, scoped, tag = 'input window, operand 1, single buffered']
    #allocation7 [shape = 's32[1]{0}', space=sflag, size = 0x4, scoped, tag = 'scoped memory for tpu_custom_call.1']
    #allocation8 [shape = 'u8[4096]{0}', space=vmem, size = 0x1000, scoped, tag = 'output window, operand 0, single buffered']
    %8 = vsyncpa [#allocation4], 0
    %9 = vsyncpa [#allocation7], 0
    %10 = vsyncpa [#allocation5], 0
    // Predicated region
    $region2: #{tpu_custom_call.1} parent=1 // pred_check
      _
    $region3: #{tpu_custom_call.1} parent=1 // pred_check_branch
      %12 = sbr.rel (0) target = $region5
    $region4: #{tpu_custom_call.1} parent=1 // pred_region
      %14 = vsyncadd [#allocation4], 0
      %s15 = sshll.u32 %s0, 4
      %s16 = int_to_ptr.hbm [resolvable:$true] %s15
      %s17 = sshll.u32 [#allocation3], 4
      %s18 = int_to_ptr.vmem [resolvable:$true] %s17
      %23 = dma.hbm_to_vmem [thread:$0]  %s16, 128, %s18, [#allocation4], 64, 64, 4
    $region5: #{tpu_custom_call.1} parent=1 // pred_fallthru
      _
    // Predicated region
    $region6: #{tpu_custom_call.1} parent=1 // pred_check
      _
    $region7: #{tpu_custom_call.1} parent=1 // pred_check_branch
      %25 = sbr.rel (0) target = $region9
    $region8: #{tpu_custom_call.1} parent=1 // pred_region
      %27 = vsyncadd [#allocation7], 0
      %s28 = sshll.u32 %s1, 4
      %s29 = int_to_ptr.hbm [resolvable:$true] %s28
      %s30 = sshll.u32 [#allocation6], 4
      %s31 = int_to_ptr.vmem [resolvable:$true] %s30
      %36 = dma.hbm_to_vmem [thread:$0]  %s29, 256, %s31, [#allocation7], 64, 64, 4
    $region9: #{tpu_custom_call.1} parent=1 // pred_fallthru
      _
    // Predicated region
    $region10: #{tpu_custom_call.1} parent=1 // pred_check
      _
    $region11: #{tpu_custom_call.1} parent=1 // pred_check_branch
      %38 = sbr.rel (0) target = $region13
    $region12: #{tpu_custom_call.1} parent=1 // pred_region
      _
    $region13: #{tpu_custom_call.1} parent=1 // pred_fallthru
      _
    // Predicated region
    $region14: #{tpu_custom_call.1} parent=1 // pred_check
      _
    $region15: #{tpu_custom_call.1} parent=1 // pred_check_branch
      %40 = sbr.rel (0) target = $region17
    $region16: #{tpu_custom_call.1} parent=1 // pred_region
      %42 = dma.done [#allocation4], 128
    $region17: #{tpu_custom_call.1} parent=1 // pred_fallthru
      _
    // Predicated region
    $region18: #{tpu_custom_call.1} parent=1 // pred_check
      _
    $region19: #{tpu_custom_call.1} parent=1 // pred_check_branch
      %44 = sbr.rel (0) target = $region21
    $region20: #{tpu_custom_call.1} parent=1 // pred_region
      %46 = dma.done [#allocation7], 256
    $region21: #{tpu_custom_call.1} parent=1 // pred_fallthru
      _
    %p48 = scmp.eq.s32.totalorder 0, 0
    // Predicated region
    $region22: #{tpu_custom_call.1} parent=1 // pred_check
      %p49 = pneg %p48
    $region23: #{tpu_custom_call.1} parent=1 // pred_check_branch
      %51 = sbr.rel (%p49) target = $region25
    $region24: #{tpu_custom_call.1} parent=1 // pred_region
      %52 = vst [vmem:[#allocation2] sm:$0xff] 0.0
      %53 = vst [vmem:[#allocation2 + $0x8] sm:$0xff] 0.0
    $region25: #{tpu_custom_call.1} parent=1 // pred_fallthru
      _
    %v54 = vld [vmem:[#allocation2] sm:$0xff]
    %v55 = vld [vmem:[#allocation2 + $0x8] sm:$0xff]
    %v56 = vld [vmem:[#allocation3] sm:$0xf]
    %v57 = vld [vmem:[#allocation3 + $0x4] sm:$0xf]
    %v58 = vld [vmem:[#allocation6] sm:$0xf]
    %v59 = vld [vmem:[#allocation6 + $0x4] sm:$0xf]
    %v60 = vld [vmem:[#allocation6 + $0x8] sm:$0xf]
    %v61 = vld [vmem:[#allocation6 + $0xc] sm:$0xf]
    %v64 = vunpack.c.l.b16 %v56
    %v65 = vunpack.c.l.b16 %v57
    %v66 = vpack.c.b16 %v65, %v64
    %v71 = vunpack.c.l.b16 %v58
    %v72 = vunpack.c.l.b16 %v59
    %v73 = vunpack.c.l.b16 %v60
    %v74 = vunpack.c.l.b16 %v61
    %v75 = vpack.c.b16 %v72, %v71
    %v76 = vpack.c.b16 %v74, %v73
    %vm79 = vcmask 261120
    %v81 = vsel %vm79, %v66, 0
    %83 = vmatpush.bf16.msra.mxu0 0
    %84 = vmatpush.bf16.msra.mxu0 0
    %85 = vmatpush.bf16.msra.mxu0 0
    %86 = vmatpush.bf16.msra.mxu0 0
    %87 = vmatpush.bf16.msra.mxu0 0
    %88 = vmatpush.bf16.msra.mxu0 0
    %89 = vmatpush.bf16.msra.mxu0 %v76
    %90 = vmatpush.bf16.msra.mxu0 %v75
    %91 = vmatmul.bf16.gmra.mxu0 %v81
    %v92 = vpop.f32.mrf.mxu0
    %v93 = vadd.f32 0.0, %v92
    %v94 = vpop.f32.mrf.mxu0
    %v95 = vadd.f32 0.0, %v94
    %96 = vdwg.mxu0
    %v97 = vadd.f32 %v54, %v93
    %v98 = vadd.f32 %v55, %v95
    %99 = vst [vmem:[#allocation2] sm:$0xff] %v97
    %100 = vst [vmem:[#allocation2 + $0x8] sm:$0xff] %v98
    // Predicated region
    $region26: #{tpu_custom_call.1} parent=1 // pred_check
      %p101 = pneg %p48
    $region27: #{tpu_custom_call.1} parent=1 // pred_check_branch
      %103 = sbr.rel (%p101) target = $region29
    $region28: #{tpu_custom_call.1} parent=1 // pred_region
      %v104 = vld [vmem:[#allocation2] sm:$0xff]
      %v105 = vld [vmem:[#allocation2 + $0x8] sm:$0xff]
      %v106 = vld [vmem:[%s2] sm:$0x1]
      %v108 = vperm.slane %v106, 0
      %v110 = vadd.f32 %v104, %v108
      %v111 = vadd.f32 %v105, %v108
      %v112 = vpack.c.bf16 %v110, %v110
      %v113 = vpack.c.bf16 %v111, %v111
      %114 = vst [vmem:[#allocation8] sm:$0xf] %v112
      %115 = vst [vmem:[#allocation8 + $0x4] sm:$0xf] %v113
    $region29: #{tpu_custom_call.1} parent=1 // pred_fallthru
      _
    // Predicated region
    $region30: #{tpu_custom_call.1} parent=1 // pred_check
      _
    $region31: #{tpu_custom_call.1} parent=1 // pred_check_branch
      %117 = sbr.rel (0) target = $region33
    $region32: #{tpu_custom_call.1} parent=1 // pred_region
      %119 = vsyncadd [#allocation5], 0
      %s120 = sshll.u32 [#allocation8], 4
      %s121 = int_to_ptr.vmem [resolvable:$true] %s120
      %s122 = sshll.u32 %s3, 4
      %s123 = int_to_ptr.hbm [resolvable:$true] %s122
      %128 = dma.vmem_to_hbm [thread:$0]  %s121, 128, %s123, [#allocation5], 64, 64, 4
    $region33: #{tpu_custom_call.1} parent=1 // pred_fallthru
      _
    // Predicated region
    $region34: #{tpu_custom_call.1} parent=1 // pred_check
      _
    $region35: #{tpu_custom_call.1} parent=1 // pred_check_branch
      %130 = sbr.rel (0) target = $region37
    $region36: #{tpu_custom_call.1} parent=1 // pred_region
      %132 = dma.done [#allocation5], 128
    $region37: #{tpu_custom_call.1} parent=1 // pred_fallthru
      _
    %133 = vsyncpa [#allocation4], 1
    %134 = vsyncpa [#allocation7], 1
    %135 = vsyncpa [#allocation5], 1

</llo_original>
